<compile_context>
chip_gen: v7x
topology: tpu7x:2x2x1
jax: 0.10.0
libtpu: 0.0.40
codegen_flags: <defaults>
</compile_context>

<pallas_src>
import jax
import jax.numpy as jnp
from jax.experimental import pallas as pl
from jax.experimental.pallas import tpu as pltpu


def _round_up(n, m):
    return ((n + m - 1) // m) * m


# ---------------------------------------------------------------------------
# Kernel
# ---------------------------------------------------------------------------
def adv_net2_kernel(x_ref, w1_ref, b1_ref, w2_ref, b2_ref, w3_ref, b3_ref, y_ref):
    # GRL forward == identity. Cast to bf16 in-register (x stays f32 in HBM; the
    # cast rides the VPU instead of a separate wrapper-side HBM pass).
    x = x_ref[...].astype(jnp.bfloat16)                              # (TB, F)

    # Linear 1 + ReLU (Dropout -> identity at inference). bf16 MXU, f32 accumulate.
    h1 = jnp.dot(x, w1_ref[...], preferred_element_type=jnp.float32) + b1_ref[...]
    h1 = jnp.maximum(h1, 0.0)                                        # (TB, mid_p) f32

    # Linear 2 + ReLU.
    h2 = jnp.dot(h1.astype(jnp.bfloat16), w2_ref[...],
                 preferred_element_type=jnp.float32) + b2_ref[...]
    h2 = jnp.maximum(h2, 0.0)                                        # (TB, mid_p) f32

    # Linear 3 (mid_p -> 1): VPU multiply + lane reduction; a width-1 MXU matmul
    # would waste >99% of a systolic-array pass.
    # TODO(synk): verify with pl.lower_as_mlir that the sublane->lane relayout in this
    # reshape stays in-register (XLU) instead of round-tripping VMEM.
    y = jnp.sum(h2 * w3_ref[...], axis=-1).reshape(1, -1) + b3_ref[...]   # (1, TB)

    # Lane-dense store: output tile is (1, 1, TB) with TB on the lane axis.
    y_ref[...] = y[None].astype(y_ref.dtype)


# ---------------------------------------------------------------------------
# Params / budgeting / tiling
# ---------------------------------------------------------------------------
def prepare_params(params, *, mid_pad_to=128):
    """One-time conversion of PyTorch-layout (out, in) Linear params to kernel layout.

    `mid` is zero-padded up to a multiple of `mid_pad_to` (lane / MXU alignment;
    128 is safe everywhere, 256 packs the v6e/v7x MXU even tighter). Exact for a
    ReLU MLP: padded h1/h2 columns are exactly zero and the w3/bias pads are zero.
    """
    mid = params["w2"].shape[0]
    mid_p = _round_up(mid, mid_pad_to)
    dm = mid_p - mid

    w1 = jnp.pad(params["w1"].T.astype(jnp.float32), ((0, 0), (0, dm)))
    b1 = jnp.pad(params["b1"].astype(jnp.float32), ((0, dm),)).reshape(1, mid_p)
    w2 = jnp.pad(params["w2"].T.astype(jnp.float32), ((0, dm), (0, dm)))
    b2 = jnp.pad(params["b2"].astype(jnp.float32), ((0, dm),)).reshape(1, mid_p)
    w3 = jnp.pad(params["w3"].reshape(-1).astype(jnp.float32), ((0, dm),))

    return {
        "w1": w1.astype(jnp.bfloat16),                          # (F, mid_p)     bf16
        "b1": b1,                                               # (1, mid_p)     f32
        "w2": w2.astype(jnp.bfloat16),                          # (mid_p, mid_p) bf16
        "b2": b2,                                               # (1, mid_p)     f32
        "w3_row": w3.reshape(1, mid_p),                         # (1, mid_p)     f32
        "b3": params["b3"].reshape(1, 1).astype(jnp.float32),   # (1, 1)         f32
    }


def _vmem_cap_bytes():
    """Generation-aware VMEM budget cap (physical capacity minus headroom)."""
    phys = 128 << 20
    try:
        phys = int(getattr(pltpu.get_tpu_info(), "vmem_capacity_bytes", phys))
    except Exception:
        pass
    # 16 MiB headroom for compiler-internal scratch (matters on v7x's 64 MiB/TC);
    # never request more than ~100 MiB even on 128 MiB parts (v5e/v6e).
    return max(16 << 20, min(phys - (16 << 20), 100 << 20))


def _vmem_need_bytes(TB, F, mid_p, x_bufs):
    x_bytes = x_bufs * TB * F * 4                                          # f32 x tiles
    w_bytes = 2 * ((F * mid_p + mid_p * mid_p) * 2 + (3 * mid_p + 1) * 4)  # <=2 copies
    act_bytes = TB * (2 * mid_p * 4 + mid_p * 2 + F * 2)                   # h1/h2 + bf16 temps
    out_bytes = 2 * TB * 4
    return int(1.5 * (x_bytes + w_bytes + act_bytes + out_bytes))


def _choose_tile_b(B, F, mid_p, x_bufs, cap):
    """Shape-aware batch tile: big enough to amortize ~0.35us/step grid overhead,
    lane/sublane aligned, shrunk to fit the VMEM budget."""
    if B <= 256:
        return max(8, _round_up(B, 8))                  # single tile, sublane aligned
    tb = max(256, min(4096, (2 << 20) // (4 * F)))      # target >= ~2 MiB f32 x tile
    tb = min(_round_up(tb, 128), _round_up(B, 128))
    while tb > 256 and _vmem_need_bytes(tb, F, mid_p, x_bufs) > cap:
        tb = _round_up(tb // 2, 128)
    return tb


# ---------------------------------------------------------------------------
# Wrapper
# ---------------------------------------------------------------------------
def _in_specs(TB, F, mid_p, *, buffered, x_bufs):
    if buffered:
        x_spec = pl.BlockSpec((TB, F), lambda i: (i, 0),
                              pipeline_mode=pl.Buffered(x_bufs))

        def const(shape):  # constant index_map -> keep a single resident copy
            return pl.BlockSpec(shape, lambda i: (0, 0), pipeline_mode=pl.Buffered(1))
    else:
        x_spec = pl.BlockSpec((TB, F), lambda i: (i, 0))

        def const(shape):
            return pl.BlockSpec(shape, lambda i: (0, 0))

    return [x_spec,
            const((F, mid_p)),      # W1
            const((1, mid_p)),      # b1
            const((mid_p, mid_p)),  # W2
            const((1, mid_p)),      # b2
            const((1, mid_p)),      # W3 row
            const((1, 1))]          # b3


def adversarial_network2_forward(x, kparams, *, tile_b=None):
    """x: (B, in_feature) float. kparams: output of prepare_params()."""
    B, F = x.shape
    mid_p = kparams["w2"].shape[0]

    cap = _vmem_cap_bytes()
    x_bufs = 3                                   # deeper x pipeline for mem-bound shapes
    TB = tile_b if tile_b is not None else _choose_tile_b(B, F, mid_p, x_bufs, cap)
    num_tiles = pl.cdiv(B, TB)
    B_pad = num_tiles * TB

    vmem_bytes = int(max(8 << 20, min(_vmem_need_bytes(TB, F, mid_p, x_bufs), cap)))

    def call(buffered):
        return pl.pallas_call(
            adv_net2_kernel,
            out_shape=jax.ShapeDtypeStruct((num_tiles, 1, TB), jnp.float32),
            grid=(num_tiles,),
            in_specs=_in_specs(TB, F, mid_p, buffered=buffered, x_bufs=x_bufs),
            out_specs=pl.BlockSpec((1, 1, TB), lambda i: (i, 0, 0)),
            compiler_params=pltpu.CompilerParams(
                dimension_semantics=("parallel",),      # shard batch tiles across TCs
                vmem_limit_bytes=vmem_bytes,
            ),
        )(x, kparams["w1"], kparams["b1"], kparams["w2"], kparams["b2"],
          kparams["w3_row"], kparams["b3"])

    if num_tiles >= 2:
        # Multi-buffering only pays off when the grid is long enough to pipeline;
        # gracefully fall back if this Pallas build rejects pipeline_mode.
        try:
            out = call(True)
        except Exception:
            out = call(False)
    else:
        out = call(False)

    return out.reshape(B_pad)[:B].reshape(B, 1)


# ---------------------------------------------------------------------------
# Reference + init
# ---------------------------------------------------------------------------
def _ref_forward(x, params):
    """Pure-JAX f32 reference mirroring the PyTorch module in eval mode."""
    h1 = jnp.maximum(x @ params["w1"].T + params["b1"], 0.0)
    h2 = jnp.maximum(h1 @ params["w2"].T + params["b2"], 0.0)
    return h2 @ params["w3"].T + params["b3"]


def init_params(key, in_feature):
    """Deterministic synthetic init matching nn.Linear shapes (PyTorch (out, in) layout)."""
    mid = in_feature // 2
    k1, k2, k3, k4, k5, k6 = jax.random.split(key, 6)

    def uni(k, shape, fan_in):
        bound = 1.0 / jnp.sqrt(fan_in)
        return jax.random.uniform(k, shape, jnp.float32, -bound, bound)

    return {
        "w1": uni(k1, (mid, in_feature), in_feature),
        "b1": uni(k2, (mid,), in_feature),
        "w2": uni(k3, (mid, mid), mid),
        "b2": uni(k4, (mid,), mid),
        "w3": uni(k5, (1, mid), mid),
        "b3": uni(k6, (1,), mid),
    }


if __name__ == "__main__":
    key = jax.random.PRNGKey(0)
    kx, kp, kx2, kp2 = jax.random.split(key, 4)

    # Small-shape check: batch=8, in_feature=32 (mid=16, zero-padded to 128).
    B, in_feature = 8, 32
    x = jax.random.normal(kx, (B, in_feature), jnp.float32)
    params = init_params(kp, in_feature)
    kparams = prepare_params(params)      # one-time layout conversion + mid padding
    y = jax.block_until_ready(adversarial_network2_forward(x, kparams))
    y_ref = _ref_forward(x, params)
    assert y.shape == (B, 1), y.shape
    # bf16 MXU inputs -> slightly looser tolerance than pure-f32.
    assert jnp.allclose(y, y_ref, atol=5e-2, rtol=5e-2), (y, y_ref)

    # Multi-tile check: exercises the batch grid (and the deeper-pipeline path).
    B2, F2 = 512, 64
    x2 = jax.random.normal(kx2, (B2, F2), jnp.float32)
    params2 = init_params(kp2, F2)
    kparams2 = prepare_params(params2)
    y2 = jax.block_until_ready(adversarial_network2_forward(x2, kparams2, tile_b=256))
    y2_ref = _ref_forward(x2, params2)
    assert y2.shape == (B2, 1), y2.shape
    assert jnp.allclose(y2, y2_ref, atol=5e-2, rtol=5e-2), float(
        jnp.max(jnp.abs(y2 - y2_ref)))

    print("KERNEL_OK")
</pallas_src>

<mosaic_0001>
module attributes {stable_mosaic.version = 11 : i64} {
  func.func @adv_net2_kernel(%arg0: i32, %arg1: memref<8x32xf32, #tpu.memory_space<vmem>>, %arg2: memref<32x128xbf16, #tpu.memory_space<vmem>>, %arg3: memref<1x128xf32, #tpu.memory_space<vmem>>, %arg4: memref<128x128xbf16, #tpu.memory_space<vmem>>, %arg5: memref<1x128xf32, #tpu.memory_space<vmem>>, %arg6: memref<1x128xf32, #tpu.memory_space<vmem>>, %arg7: memref<1x1xf32, #tpu.memory_space<vmem>>, %arg8: memref<1x1x8xf32, #tpu.memory_space<vmem>>) attributes {dimension_semantics = [#tpu.dimension_semantics<parallel>], iteration_bounds = array<i64: 1>, scalar_prefetch = 0 : i64, scratch_operands = 0 : i64, tpu.core_type = #tpu.core_type<tc>, window_params = [{transform_indices = @transform_0, window_bounds = array<i64: 8, 32>}, {pipeline_mode = #tpu.pipeline_mode<synchronous>, transform_indices = @transform_1, window_bounds = array<i64: 32, 128>}, {pipeline_mode = #tpu.pipeline_mode<synchronous>, transform_indices = @transform_2, window_bounds = array<i64: 1, 128>}, {pipeline_mode = #tpu.pipeline_mode<synchronous>, transform_indices = @transform_3, window_bounds = array<i64: 128, 128>}, {pipeline_mode = #tpu.pipeline_mode<synchronous>, transform_indices = @transform_4, window_bounds = array<i64: 1, 128>}, {pipeline_mode = #tpu.pipeline_mode<synchronous>, transform_indices = @transform_5, window_bounds = array<i64: 1, 128>}, {pipeline_mode = #tpu.pipeline_mode<synchronous>, transform_indices = @transform_6, window_bounds = array<i64: 1, 1>}, {transform_indices = @transform_7, window_bounds = array<i64: 1, 1, 8>}]} {
    %c0 = arith.constant 0 : index
    %c0_0 = arith.constant 0 : index
    %0 = vector.load %arg1[%c0, %c0_0] : memref<8x32xf32, #tpu.memory_space<vmem>>, vector<8x32xf32>
    %1 = arith.truncf %0 : vector<8x32xf32> to vector<8x32xbf16>
    %c0_1 = arith.constant 0 : index
    %c0_2 = arith.constant 0 : index
    %2 = vector.load %arg2[%c0_1, %c0_2] : memref<32x128xbf16, #tpu.memory_space<vmem>>, vector<32x128xbf16>
    %cst = arith.constant dense<0.000000e+00> : vector<8x128xf32>
    %3 = tpu.matmul %1, %2, %cst {dimension_numbers = #tpu.dot_dimension_numbers<[1], [0], [0], [1], [0, 0, 1, 1], [], []>} : vector<8x32xbf16>, vector<32x128xbf16>, vector<8x128xf32> -> vector<8x128xf32>
    %c0_3 = arith.constant 0 : index
    %c0_4 = arith.constant 0 : index
    %4 = vector.load %arg3[%c0_3, %c0_4] : memref<1x128xf32, #tpu.memory_space<vmem>>, vector<1x128xf32>
    %5 = vector.broadcast %4 : vector<1x128xf32> to vector<8x128xf32>
    %6 = arith.addf %3, %5 : vector<8x128xf32>
    %cst_5 = arith.constant 0.000000e+00 : f32
    %7 = vector.broadcast %cst_5 : f32 to vector<8x128xf32>
    %8 = arith.maximumf %6, %7 : vector<8x128xf32>
    %9 = arith.truncf %8 : vector<8x128xf32> to vector<8x128xbf16>
    %c0_6 = arith.constant 0 : index
    %c0_7 = arith.constant 0 : index
    %10 = vector.load %arg4[%c0_6, %c0_7] : memref<128x128xbf16, #tpu.memory_space<vmem>>, vector<128x128xbf16>
    %cst_8 = arith.constant dense<0.000000e+00> : vector<8x128xf32>
    %11 = tpu.matmul %9, %10, %cst_8 {dimension_numbers = #tpu.dot_dimension_numbers<[1], [0], [0], [1], [0, 0, 1, 1], [], []>} : vector<8x128xbf16>, vector<128x128xbf16>, vector<8x128xf32> -> vector<8x128xf32>
    %c0_9 = arith.constant 0 : index
    %c0_10 = arith.constant 0 : index
    %12 = vector.load %arg5[%c0_9, %c0_10] : memref<1x128xf32, #tpu.memory_space<vmem>>, vector<1x128xf32>
    %13 = vector.broadcast %12 : vector<1x128xf32> to vector<8x128xf32>
    %14 = arith.addf %11, %13 : vector<8x128xf32>
    %cst_11 = arith.constant 0.000000e+00 : f32
    %15 = vector.broadcast %cst_11 : f32 to vector<8x128xf32>
    %16 = arith.maximumf %14, %15 : vector<8x128xf32>
    %c0_12 = arith.constant 0 : index
    %c0_13 = arith.constant 0 : index
    %17 = vector.load %arg6[%c0_12, %c0_13] : memref<1x128xf32, #tpu.memory_space<vmem>>, vector<1x128xf32>
    %18 = vector.broadcast %17 : vector<1x128xf32> to vector<8x128xf32>
    %19 = arith.mulf %16, %18 : vector<8x128xf32>
    %cst_14 = arith.constant dense<0.000000e+00> : vector<8xf32>
    %20 = vector.multi_reduction <add>, %19, %cst_14 [1] : vector<8x128xf32> to vector<8xf32>
    %21 = vector.shape_cast %20 : vector<8xf32> to vector<1x8xf32>
    %c0_15 = arith.constant 0 : index
    %c0_16 = arith.constant 0 : index
    %22 = vector.load %arg7[%c0_15, %c0_16] : memref<1x1xf32, #tpu.memory_space<vmem>>, vector<1x1xf32>
    %23 = vector.broadcast %22 : vector<1x1xf32> to vector<1x8xf32>
    %24 = arith.addf %21, %23 : vector<1x8xf32>
    %25 = vector.shape_cast %24 : vector<1x8xf32> to vector<1x1x8xf32>
    %c0_17 = arith.constant 0 : index
    %c0_18 = arith.constant 0 : index
    %c0_19 = arith.constant 0 : index
    %26 = vector.load %arg8[%c0_17, %c0_18, %c0_19] : memref<1x1x8xf32, #tpu.memory_space<vmem>>, vector<1x1x8xf32>
    tpu.vector_store %arg8[%c0_17, %c0_18, %c0_19], %25 {strides = array<i32>} : memref<1x1x8xf32, #tpu.memory_space<vmem>>, vector<1x1x8xf32>,
    return
  }
  func.func @transform_0(%arg0: i32) -> (i32, i32) {
    %c0_i32 = arith.constant 0 : i32
    %c0_i32_0 = arith.constant 0 : i32
    return %arg0, %c0_i32 : i32, i32
  }
  func.func @transform_1(%arg0: i32) -> (i32, i32) {
    %c0_i32 = arith.constant 0 : i32
    %c0_i32_0 = arith.constant 0 : i32
    %c0_i32_1 = arith.constant 0 : i32
    return %c0_i32, %c0_i32_0 : i32, i32
  }
  func.func @transform_2(%arg0: i32) -> (i32, i32) {
    %c0_i32 = arith.constant 0 : i32
    %c0_i32_0 = arith.constant 0 : i32
    %c0_i32_1 = arith.constant 0 : i32
    return %c0_i32, %c0_i32_0 : i32, i32
  }
  func.func @transform_3(%arg0: i32) -> (i32, i32) {
    %c0_i32 = arith.constant 0 : i32
    %c0_i32_0 = arith.constant 0 : i32
    %c0_i32_1 = arith.constant 0 : i32
    return %c0_i32, %c0_i32_0 : i32, i32
  }
  func.func @transform_4(%arg0: i32) -> (i32, i32) {
    %c0_i32 = arith.constant 0 : i32
    %c0_i32_0 = arith.constant 0 : i32
    %c0_i32_1 = arith.constant 0 : i32
    return %c0_i32, %c0_i32_0 : i32, i32
  }
  func.func @transform_5(%arg0: i32) -> (i32, i32) {
    %c0_i32 = arith.constant 0 : i32
    %c0_i32_0 = arith.constant 0 : i32
    %c0_i32_1 = arith.constant 0 : i32
    return %c0_i32, %c0_i32_0 : i32, i32
  }
  func.func @transform_6(%arg0: i32) -> (i32, i32) {
    %c0_i32 = arith.constant 0 : i32
    %c0_i32_0 = arith.constant 0 : i32
    %c0_i32_1 = arith.constant 0 : i32
    return %c0_i32, %c0_i32_0 : i32, i32
  }
  func.func @transform_7(%arg0: i32) -> (i32, i32, i32) {
    %c0_i32 = arith.constant 0 : i32
    %c0_i32_0 = arith.constant 0 : i32
    %c0_i32_1 = arith.constant 0 : i32
    return %arg0, %c0_i32, %c0_i32_0 : i32, i32, i32
  }
}

</mosaic_0001>

<llo_original>
// kernel: tpu_custom_call.1
$region0: #{tpu_custom_call.1}
  #allocation0 [shape = 'u32[]', space=smem, size = 0x4, offset = 0x4, fixed_abs, tag = 'smem constant byte address 0x4 - core index']
  #allocation1 [shape = 'u32[144,128]{1,0:T(1,128)}', space=vmem, size = 0x12000, scoped, tag = 'internal scratch']
  #allocation2 [shape = 'f32[1,1]{1,0:T(1,128)S(1)}', space=vmem, size = 0x200, scoped, tag = 'scoped memory for tpu_custom_call.1']
  %s0 = inlined_call_operand.hbm [shape: f32[8,32], index: 0, kind: input, shape index: {}]
  %s1 = inlined_call_operand.hbm [shape: bf16[32,128], index: 1, kind: input, shape index: {}]
  %s2 = inlined_call_operand.vmem [shape: f32[1,128], index: 2, kind: input, shape index: {}]
  %s3 = inlined_call_operand.hbm [shape: bf16[128,128], index: 3, kind: input, shape index: {}]
  %s4 = inlined_call_operand.vmem [shape: f32[1,128], index: 4, kind: input, shape index: {}]
  %s5 = inlined_call_operand.vmem [shape: f32[1,128], index: 5, kind: input, shape index: {}]
  %s6 = inlined_call_operand.<no memory space> [shape: f32[1,1], index: 6, kind: input, shape index: {}]
  %s7 = inlined_call_operand.hbm [shape: f32[1,1,8], index: 7, kind: output, shape index: {}]
  %s8 = sld [smem:[#allocation0]]
  $region50: #{tpu_custom_call.1} parent=0
    _
  %s10 = ssub.s32 1, %s8
  %s11 = scalar_select 0, %s10, %s8
  %v12 = vstv %s6
  %13 = vst [vmem:[#allocation2] sm:$0x1] %v12
  $region1: #{tpu_custom_call.1} parent=0
    #allocation3 [shape = 'u8[4096]{0}', space=vmem, size = 0x1000, scoped, tag = 'input window, operand 0, single buffered']
    #allocation4 [shape = 's32[1]{0}', space=sflag, size = 0x4, scoped, tag = 'scoped memory for tpu_custom_call.1']
    #allocation5 [shape = 's32[1]{0}', space=sflag, size = 0x4, scoped, tag = 'scoped memory for tpu_custom_call.1']
    #allocation6 [shape = 'u8[8192]{0}', space=vmem, size = 0x2000, scoped, tag = 'input window, operand 1, single buffered']
    #allocation7 [shape = 's32[1]{0}', space=sflag, size = 0x4, scoped, tag = 'scoped memory for tpu_custom_call.1']
    #allocation8 [shape = 'u8[32768]{0}', space=vmem, size = 0x8000, scoped, tag = 'input window, operand 3, single buffered']
    #allocation9 [shape = 'u8[512]{0}', space=vmem, size = 0x400, scoped, tag = 'output window, operand 0, single buffered']
    %14 = vsyncpa [#allocation4], 0
    %15 = vsyncpa [#allocation7], 0
    %16 = vsyncpa [#allocation5], 0
    // Predicated region
    $region2: #{tpu_custom_call.1} parent=1 // pred_check
      _
    $region3: #{tpu_custom_call.1} parent=1 // pred_check_branch
      %18 = sbr.rel (0) target = $region5
    $region4: #{tpu_custom_call.1} parent=1 // pred_region
      %s20 = ssub.s32 128, 128
      %21 = vsyncadd [#allocation4], %s20
      %s23 = sshll.u32 [#allocation3], 4
      %s24 = int_to_ptr.vmem [resolvable:$true] %s23
      %26 = dma.hbm_to_vmem [thread:$0]  %s0, 128, %s24, [#allocation4]
    $region5: #{tpu_custom_call.1} parent=1 // pred_fallthru
      _
    // Predicated region
    $region6: #{tpu_custom_call.1} parent=1 // pred_check
      _
    $region7: #{tpu_custom_call.1} parent=1 // pred_check_branch
      %28 = sbr.rel (0) target = $region9
    $region8: #{tpu_custom_call.1} parent=1 // pred_region
      %s30 = ssub.s32 256, 256
      %31 = vsyncadd [#allocation7], %s30
      %s32 = sshll.u32 [#allocation6], 4
      %s33 = int_to_ptr.vmem [resolvable:$true] %s32
      %38 = dma.hbm_to_vmem [thread:$0]  %s1, 256, %s33, [#allocation7], 64, 64, 4
    $region9: #{tpu_custom_call.1} parent=1 // pred_fallthru
      _
    // Predicated region
    $region10: #{tpu_custom_call.1} parent=1 // pred_check
      _
    $region11: #{tpu_custom_call.1} parent=1 // pred_check_branch
      %40 = sbr.rel (0) target = $region13
    $region12: #{tpu_custom_call.1} parent=1 // pred_region
      _
    $region13: #{tpu_custom_call.1} parent=1 // pred_fallthru
      _
    // Predicated region
    $region14: #{tpu_custom_call.1} parent=1 // pred_check
      _
    $region15: #{tpu_custom_call.1} parent=1 // pred_check_branch
      %42 = sbr.rel (0) target = $region17
    $region16: #{tpu_custom_call.1} parent=1 // pred_region
      %s44 = ssub.s32 1024, 1024
      %45 = vsyncadd [#allocation7], %s44
      %s46 = sshll.u32 [#allocation8], 4
      %s47 = int_to_ptr.vmem [resolvable:$true] %s46
      %52 = dma.hbm_to_vmem [thread:$0]  %s3, 1024, %s47, [#allocation7], 64, 64, 4
    $region17: #{tpu_custom_call.1} parent=1 // pred_fallthru
      _
    // Predicated region
    $region18: #{tpu_custom_call.1} parent=1 // pred_check
      _
    $region19: #{tpu_custom_call.1} parent=1 // pred_check_branch
      %54 = sbr.rel (0) target = $region21
    $region20: #{tpu_custom_call.1} parent=1 // pred_region
      _
    $region21: #{tpu_custom_call.1} parent=1 // pred_fallthru
      _
    // Predicated region
    $region22: #{tpu_custom_call.1} parent=1 // pred_check
      _
    $region23: #{tpu_custom_call.1} parent=1 // pred_check_branch
      %56 = sbr.rel (0) target = $region25
    $region24: #{tpu_custom_call.1} parent=1 // pred_region
      _
    $region25: #{tpu_custom_call.1} parent=1 // pred_fallthru
      _
    // Predicated region
    $region26: #{tpu_custom_call.1} parent=1 // pred_check
      _
    $region27: #{tpu_custom_call.1} parent=1 // pred_check_branch
      %58 = sbr.rel (0) target = $region29
    $region28: #{tpu_custom_call.1} parent=1 // pred_region
      _
    $region29: #{tpu_custom_call.1} parent=1 // pred_fallthru
      _
    // Predicated region
    $region30: #{tpu_custom_call.1} parent=1 // pred_check
      _
    $region31: #{tpu_custom_call.1} parent=1 // pred_check_branch
      %60 = sbr.rel (0) target = $region33
    $region32: #{tpu_custom_call.1} parent=1 // pred_region
      %61 = dma.done [#allocation4], 128
    $region33: #{tpu_custom_call.1} parent=1 // pred_fallthru
      _
    // Predicated region
    $region34: #{tpu_custom_call.1} parent=1 // pred_check
      _
    $region35: #{tpu_custom_call.1} parent=1 // pred_check_branch
      %63 = sbr.rel (0) target = $region37
    $region36: #{tpu_custom_call.1} parent=1 // pred_region
      %64 = dma.done [#allocation7], 256
    $region37: #{tpu_custom_call.1} parent=1 // pred_fallthru
      _
    // Predicated region
    $region38: #{tpu_custom_call.1} parent=1 // pred_check
      _
    $region39: #{tpu_custom_call.1} parent=1 // pred_check_branch
      %66 = sbr.rel (0) target = $region41
    $region40: #{tpu_custom_call.1} parent=1 // pred_region
      %67 = dma.done [#allocation7], 1024
    $region41: #{tpu_custom_call.1} parent=1 // pred_fallthru
      _
    %v69 = vld [vmem:[#allocation3] sm:$0xff]
    %v70 = vpack.c.bf16 %v69, %v69
    %v71 = vld [vmem:[#allocation6] sm:$0xf]
    %v72 = vld [vmem:[#allocation6 + $0x4] sm:$0xf]
    %v73 = vld [vmem:[#allocation6 + $0x8] sm:$0xf]
    %v74 = vld [vmem:[#allocation6 + $0xc] sm:$0xf]
    %v75 = vld [vmem:[%s2] sm:$0x1]
    %v77 = vlaneseq
    %v78 = vshrl.u32 %v77, 7
    %v79 = vsub.s32 0, %v78
    %v80 = vrot.slane %v75, %v79
    %v86 = vunpack.c.l.b16 %v71
    %v87 = vunpack.c.l.b16 %v72
    %v88 = vunpack.c.l.b16 %v73
    %v89 = vunpack.c.l.b16 %v74
    %v90 = vpack.c.b16 %v87, %v86
    %v91 = vpack.c.b16 %v89, %v88
    %vm94 = vcmask 261120
    %v96 = vsel %vm94, %v70, 0
    %98 = vmatprep.subr.bf16.mxu0 0
    %99 = vmatpush1.bf16.msra.mxu0 %v90
    %100 = vmatprep.subr.bf16.mxu0 0
    %101 = vmatpush1.bf16.msra.mxu0 %v91
    %102 = vmatprep.subr.bf16.mxu0 0
    %103 = vmatpush1.bf16.msra.mxu0 0
    %104 = vmatprep.subr.bf16.mxu0 0
    %105 = vmatpush1.bf16.msra.mxu0 0
    %106 = vmatprep.subr.bf16.mxu0 0
    %107 = vmatpush1.bf16.msra.mxu0 0
    %108 = vmatprep.subr.bf16.mxu0 0
    %109 = vmatpush1.bf16.msra.mxu0 0
    %110 = vmatprep.subr.bf16.mxu0 0
    %111 = vmatpush1.bf16.msra.mxu0 0
    %112 = vmatprep.subr.bf16.mxu0 0
    %113 = vmatpush1.bf16.msra.mxu0 0
    %114 = vmatprep.subr.bf16.mxu0 0
    %115 = vmatpush1.bf16.msra.mxu0 0
    %116 = vmatprep.subr.bf16.mxu0 0
    %117 = vmatpush1.bf16.msra.mxu0 0
    %118 = vmatprep.subr.bf16.mxu0 0
    %119 = vmatpush1.bf16.msra.mxu0 0
    %120 = vmatprep.subr.bf16.mxu0 0
    %121 = vmatpush1.bf16.msra.mxu0 0
    %122 = vmatprep.subr.bf16.mxu0 0
    %123 = vmatpush1.bf16.msra.mxu0 0
    %124 = vmatprep.subr.bf16.mxu0 0
    %125 = vmatpush1.bf16.msra.mxu0 0
    %126 = vmatprep.subr.bf16.mxu0 0
    %127 = vmatpush1.bf16.msra.mxu0 0
    %128 = vmatprep.subr.bf16.mxu0 0
    %129 = vmatpush1.bf16.msra.mxu0 0
    %130 = vmatprep.mubr.bf16.mxu0 0
    %131 = vmatmul.mubr.bf16.gmra.mrb[0].mxu0 %v96
    %v132 = vpop.f32.mrb[0].mxu0
    %v133 = vadd.f32 %v80, %v132
    %v134 = vpop.f32.mrb[0].mxu0
    %v135 = vpop.f32.mrb[0].mxu0
    %v136 = vpop.f32.mrb[0].mxu0
    %137 = vdwg.mxu0
    %v138 = vmax.f32 %v133, 0.0
    %v139 = vpack.c.bf16 %v138, %v138
    %v140 = vld [vmem:[#allocation8] sm:$0xf]
    %v141 = vld [vmem:[#allocation8 + $0x4] sm:$0xf]
    %v142 = vld [vmem:[#allocation8 + $0x8] sm:$0xf]
    %v143 = vld [vmem:[#allocation8 + $0xc] sm:$0xf]
    %v144 = vld [vmem:[#allocation8 + $0x10] sm:$0xf]
    %v145 = vld [vmem:[#allocation8 + $0x14] sm:$0xf]
    %v146 = vld [vmem:[#allocation8 + $0x18] sm:$0xf]
    %v147 = vld [vmem:[#allocation8 + $0x1c] sm:$0xf]
    %v148 = vld [vmem:[#allocation8 + $0x20] sm:$0xf]
    %v149 = vld [vmem:[#allocation8 + $0x24] sm:$0xf]
    %v150 = vld [vmem:[#allocation8 + $0x28] sm:$0xf]
    %v151 = vld [vmem:[#allocation8 + $0x2c] sm:$0xf]
    %v152 = vld [vmem:[#allocation8 + $0x30] sm:$0xf]
    %v153 = vld [vmem:[#allocation8 + $0x34] sm:$0xf]
    %v154 = vld [vmem:[#allocation8 + $0x38] sm:$0xf]
    %v155 = vld [vmem:[#allocation8 + $0x3c] sm:$0xf]
    %v156 = vld [vmem:[%s4] sm:$0x1]
    %v158 = vlaneseq
    %v159 = vshrl.u32 %v158, 7
    %v160 = vsub.s32 0, %v159
    %v161 = vrot.slane %v156, %v160
    %v179 = vunpack.c.l.b16 %v140
    %v180 = vunpack.c.l.b16 %v141
    %v181 = vunpack.c.l.b16 %v142
    %v182 = vunpack.c.l.b16 %v143
    %v183 = vunpack.c.l.b16 %v144
    %v184 = vunpack.c.l.b16 %v145
    %v185 = vunpack.c.l.b16 %v146
    %v186 = vunpack.c.l.b16 %v147
    %v187 = vunpack.c.l.b16 %v148
    %v188 = vunpack.c.l.b16 %v149
    %v189 = vunpack.c.l.b16 %v150
    %v190 = vunpack.c.l.b16 %v151
    %v191 = vunpack.c.l.b16 %v152
    %v192 = vunpack.c.l.b16 %v153
    %v193 = vunpack.c.l.b16 %v154
    %v194 = vunpack.c.l.b16 %v155
    %v195 = vpack.c.b16 %v180, %v179
    %v196 = vpack.c.b16 %v182, %v181
    %v197 = vpack.c.b16 %v184, %v183
    %v198 = vpack.c.b16 %v186, %v185
    %v199 = vpack.c.b16 %v188, %v187
    %v200 = vpack.c.b16 %v190, %v189
    %v201 = vpack.c.b16 %v192, %v191
    %v202 = vpack.c.b16 %v194, %v193
    %211 = vmatprep.subr.bf16.mxu0 0
    %212 = vmatpush1.bf16.msra.mxu0 %v195
    %213 = vmatprep.subr.bf16.mxu0 0
    %214 = vmatpush1.bf16.msra.mxu0 %v196
    %215 = vmatprep.subr.bf16.mxu0 0
    %216 = vmatpush1.bf16.msra.mxu0 %v197
    %217 = vmatprep.subr.bf16.mxu0 0
    %218 = vmatpush1.bf16.msra.mxu0 %v198
    %219 = vmatprep.subr.bf16.mxu0 0
    %220 = vmatpush1.bf16.msra.mxu0 %v199
    %221 = vmatprep.subr.bf16.mxu0 0
    %222 = vmatpush1.bf16.msra.mxu0 %v200
    %223 = vmatprep.subr.bf16.mxu0 0
    %224 = vmatpush1.bf16.msra.mxu0 %v201
    %225 = vmatprep.subr.bf16.mxu0 0
    %226 = vmatpush1.bf16.msra.mxu0 %v202
    %227 = vmatprep.subr.bf16.mxu0 0
    %228 = vmatpush1.bf16.msra.mxu0 0
    %229 = vmatprep.subr.bf16.mxu0 0
    %230 = vmatpush1.bf16.msra.mxu0 0
    %231 = vmatprep.subr.bf16.mxu0 0
    %232 = vmatpush1.bf16.msra.mxu0 0
    %233 = vmatprep.subr.bf16.mxu0 0
    %234 = vmatpush1.bf16.msra.mxu0 0
    %235 = vmatprep.subr.bf16.mxu0 0
    %236 = vmatpush1.bf16.msra.mxu0 0
    %237 = vmatprep.subr.bf16.mxu0 0
    %238 = vmatpush1.bf16.msra.mxu0 0
    %239 = vmatprep.subr.bf16.mxu0 0
    %240 = vmatpush1.bf16.msra.mxu0 0
    %241 = vmatprep.subr.bf16.mxu0 0
    %242 = vmatpush1.bf16.msra.mxu0 0
    %243 = vmatprep.mubr.bf16.mxu0 0
    %244 = vmatmul.mubr.bf16.gmra.mrb[0].mxu0 %v139
    %v245 = vpop.f32.mrb[0].mxu0
    %v246 = vadd.f32 %v161, %v245
    %v247 = vpop.f32.mrb[0].mxu0
    %v248 = vpop.f32.mrb[0].mxu0
    %v249 = vpop.f32.mrb[0].mxu0
    %250 = vdwg.mxu0
    %v251 = vmax.f32 %v246, 0.0
    %v252 = vld [vmem:[%s5] sm:$0x1]
    %v254 = vlaneseq
    %v255 = vshrl.u32 %v254, 7
    %v256 = vsub.s32 0, %v255
    %v257 = vrot.slane %v252, %v256
    %v259 = vmul.f32 %v251, %v257
    %260 = vadd.xlane.f32.xlu0 %v259
    %v261 = vpop.xlane.xlu0 %260
    %v262 = vld [vmem:[#allocation2] sm:$0x1]
    %264 = vset.pattern.permute.xlu0 0
    %265 = vperm.xlu0 %264, %v262
    %v266 = vpop.permute.xlu0 %265
    %v268 = vlaneseq
    %v269 = vshrl.u32 %v268, 7
    %v270 = vsub.s32 0, %v269
    %v271 = vrot.slane %v266, %v270
    %v272 = vadd.f32 %v261, %v271
    %v274 = vlaneseq
    %v275 = vand.u32 %v274, 127
    %v276 = vlaneseq
    %v277 = vshrl.u32 %v276, 7
    %v278 = vsub.s32 %v275, %v277
    %v279 = vrot.slane %v272, %v278
    %vm281 = vcmask 57344
    %282 = vst.msk [vmem:[#allocation9] sm:$0x1] %vm281, %v279
    // Predicated region
    $region42: #{tpu_custom_call.1} parent=1 // pred_check
      _
    $region43: #{tpu_custom_call.1} parent=1 // pred_check_branch
      %284 = sbr.rel (0) target = $region45
    $region44: #{tpu_custom_call.1} parent=1 // pred_region
      %s286 = ssub.s32 16, 16
      %287 = vsyncadd [#allocation5], %s286
      %s289 = sshll.u32 [#allocation9], 4
      %s290 = int_to_ptr.vmem [resolvable:$true] %s289
      %292 = dma.vmem_to_hbm [thread:$0]  %s290, 16, %s7, [#allocation5]
    $region45: #{tpu_custom_call.1} parent=1 // pred_fallthru
      _
    // Predicated region
    $region46: #{tpu_custom_call.1} parent=1 // pred_check
      _
    $region47: #{tpu_custom_call.1} parent=1 // pred_check_branch
      %294 = sbr.rel (0) target = $region49
    $region48: #{tpu_custom_call.1} parent=1 // pred_region
      %295 = dma.done [#allocation5], 16
    $region49: #{tpu_custom_call.1} parent=1 // pred_fallthru
      _
    %296 = vsyncpa [#allocation4], 1
    %297 = vsyncpa [#allocation7], 1
    %298 = vsyncpa [#allocation5], 1

</llo_original>
